<compile_context>
chip_gen: v7x
topology: tpu7x:2x2x1
jax: 0.10.0
libtpu: 0.0.40
codegen_flags: <defaults>
</compile_context>

<pallas_src>
import functools
import warnings

import jax
import jax.numpy as jnp
from jax.experimental import pallas as pl
from jax.experimental.pallas import tpu as pltpu

# If XLA cannot consume a donated buffer it only warns; keep the log clean.
warnings.filterwarnings("ignore", message="Some donated buffers were not usable")

_LANES = 128  # lane-dense minor dim


def _sublane_multiple(dtype) -> int:
    # (8,128) is the 32-bit vreg tile; packed dtypes need 16 / 32 sublanes.
    itemsize = jnp.dtype(dtype).itemsize
    return max(8, 32 // max(1, itemsize))


def _device_kind() -> str:
    try:
        return jax.devices()[0].device_kind.lower()
    except Exception:  # pragma: no cover - defensive (e.g. interpret mode)
        return ""


def _pick_block_rows(rows: int, dtype) -> int:
    """Rows per grid block (static, decided at trace time)."""
    kind = _device_kind()
    sub = _sublane_multiple(dtype)
    itemsize = jnp.dtype(dtype).itemsize

    # ~2 MiB per array block on v7x, ~1 MiB elsewhere:
    #   4 arrays x 2 buffers x block -> 16 MiB (v7x, <32 MiB scoped default)
    #                                    8 MiB (v5e/v6e, <16 MiB default).
    target_bytes = (2 << 20) if "v7" in kind else (1 << 20)
    max_rows = max(sub, (target_bytes // (_LANES * itemsize)) // sub * sub)

    def round_up(a, m):
        return ((a + m - 1) // m) * m

    if rows > max_rows:
        return max_rows  # sublane-aligned; last block is partial (masked)
    if "v7" in kind and rows >= 2 * sub:
        # v7x has 2 TensorCores: give the "parallel" axis at least 2 blocks.
        return min(rows, round_up(pl.cdiv(rows, 2), sub))
    return rows  # single full-extent block (always a legal block shape)


# ---------------------------------------------------------------------------
# Kernel: elementwise "remove consistent pixels" + prev_frame update.
# ---------------------------------------------------------------------------
def _rcp_kernel(thr_ref, x_ref, prev_ref, newx_ref, newprev_ref):
    thr = thr_ref[0]                 # SMEM scalar (runtime threshold)
    x = x_ref[...]
    p = prev_ref[...]
    # Same predicate as PyTorch: mask = |x - prev| < threshold.
    # (NaN -> mask False -> x kept, prev updated with x, matching torch.)
    mask = jnp.abs(x - p) < thr
    newx_ref[...] = jnp.where(mask, jnp.zeros_like(x), x)
    newprev_ref[...] = jnp.where(mask, p, x)


@functools.partial(jax.jit, donate_argnums=(0, 1))
def _remove_consistent_pixels(x, prev_frame, threshold):
    """Returns (new_x, new_prev_frame), both with x's shape/dtype. In place."""
    orig_shape = x.shape
    total = x.size
    dtype = x.dtype

    pad = (-total) % _LANES          # only pad to a lane multiple if needed
    xf = x.reshape(-1)
    pf = prev_frame.reshape(-1)
    if pad:
        xf = jnp.pad(xf, (0, pad))
        pf = jnp.pad(pf, (0, pad))
    rows = (total + pad) // _LANES
    xf = xf.reshape(rows, _LANES)
    pf = pf.reshape(rows, _LANES)

    tr = _pick_block_rows(rows, dtype)
    grid = (pl.cdiv(rows, tr),)      # over-cover; edge block is masked

    thr = jnp.asarray(threshold, dtype=jnp.float32).reshape(1)

    tile_spec = pl.BlockSpec((tr, _LANES), lambda i: (i, 0))
    smem_spec = pl.BlockSpec(memory_space=pltpu.MemorySpace.SMEM)

    new_x, new_prev = pl.pallas_call(
        _rcp_kernel,
        out_shape=(jax.ShapeDtypeStruct(xf.shape, dtype),
                   jax.ShapeDtypeStruct(pf.shape, prev_frame.dtype)),
        grid=grid,
        in_specs=[smem_spec, tile_spec, tile_spec],
        out_specs=(tile_spec, tile_spec),
        input_output_aliases={1: 0, 2: 1},   # x -> new_x, prev -> new_prev
        compiler_params=pltpu.CompilerParams(
            dimension_semantics=("parallel",)),
    )(thr, xf, pf)

    if pad:
        new_x = new_x.reshape(-1)[:total]
        new_prev = new_prev.reshape(-1)[:total]
    return new_x.reshape(orig_shape), new_prev.reshape(orig_shape)


# ---------------------------------------------------------------------------
# Python-side stateful wrappers mirroring the nn.Module behaviour.
# ---------------------------------------------------------------------------
class LoggingLayer:
    id = 1

    def __init__(self, name="", enabled=False):
        self.name = name
        self.enabled = enabled
        self.added_id = False

    def enable_logging(self):
        self.enabled = True

    def disable_logging(self):
        self.enabled = False

    def get(self):
        pass

    def reset(self):
        pass

    def reset_history(self):
        pass


class RemoveConsistentPixels(LoggingLayer):
    def __init__(self, threshold=0.05, name="", enable_training=False,
                 enabled=True, **kwargs):
        super().__init__(name=name, enabled=enabled)
        self.threshold = threshold
        self._thr = jnp.asarray(threshold, dtype=jnp.float32)
        self.prev_frame = None
        self.enable_training = enable_training

    def __call__(self, x):
        return self.forward(x)

    def forward(self, x):
        # TODO(synk): torch.is_grad_enabled()/enable_training gating has no
        # JAX equivalent; this wrapper always takes the inference path.
        if self.enabled:
            if self.prev_frame is None:
                self.prev_frame = x          # x.detach() equivalent
                return x
            # NOTE: x and self.prev_frame are donated (in-place update, same
            # as the PyTorch module's x[mask] = 0 in-place semantics).
            new_x, new_prev = _remove_consistent_pixels(
                x, self.prev_frame, self._thr)
            self.prev_frame = new_prev
            return new_x
        return x

    def disable_logging(self):
        pass

    def enable_logging(self):
        pass

    def reset_history(self):
        self.prev_frame = None


# ---------------------------------------------------------------------------
if __name__ == "__main__":
    key = jax.random.PRNGKey(0)
    k1, k2, k3 = jax.random.split(key, 3)

    N, C, H, W = 2, 4, 16, 16
    THRESH = 0.05
    x1 = jax.random.normal(k1, (N, C, H, W), dtype=jnp.float32)
    x2 = jax.random.normal(k2, (N, C, H, W), dtype=jnp.float32)
    x3 = jax.random.normal(k3, (N, C, H, W), dtype=jnp.float32)

    # Pure-JAX reference, computed up front because x / prev_frame buffers
    # are donated to the jitted kernel call (in-place update).
    mask2 = jnp.abs(x2 - x1) < THRESH
    ref_y2 = jnp.where(mask2, 0.0, x2)
    ref_prev2 = jnp.where(mask2, x1, x2)
    mask3 = jnp.abs(x3 - ref_prev2) < THRESH
    ref_y3 = jnp.where(mask3, 0.0, x3)
    ref_prev3 = jnp.where(mask3, ref_prev2, x3)
    jax.block_until_ready((ref_y2, ref_prev2, ref_y3, ref_prev3))

    layer = RemoveConsistentPixels(threshold=THRESH, name="rcp", enabled=True)

    # Step 1: first call just stores prev_frame and returns x unchanged.
    y1 = jax.block_until_ready(layer(x1))
    assert jnp.array_equal(y1, x1)

    # Step 2: masked removal against prev_frame = x1 (x1/x2 donated here).
    y2 = jax.block_until_ready(layer(x2))
    assert y2.shape == (N, C, H, W) and y2.dtype == jnp.float32
    assert jnp.allclose(y2, ref_y2)
    assert jnp.allclose(jax.block_until_ready(layer.prev_frame), ref_prev2)

    # Step 3: state carries forward (prev from step 2 and x3 donated here).
    y3 = jax.block_until_ready(layer(x3))
    assert jnp.allclose(y3, ref_y3)
    assert jnp.allclose(jax.block_until_ready(layer.prev_frame), ref_prev3)

    print("KERNEL_OK")
</pallas_src>

<mosaic_0001>
module attributes {stable_mosaic.version = 11 : i64} {
  func.func @_rcp_kernel(%arg0: i32, %arg1: memref<1xf32, #tpu.memory_space<smem>>, %arg2: memref<16x128xf32, #tpu.memory_space<vmem>>, %arg3: memref<16x128xf32, #tpu.memory_space<vmem>>, %arg4: memref<16x128xf32, #tpu.memory_space<vmem>>, %arg5: memref<16x128xf32, #tpu.memory_space<vmem>>) attributes {dimension_semantics = [#tpu.dimension_semantics<parallel>], iteration_bounds = array<i64: 1>, scalar_prefetch = 0 : i64, scratch_operands = 0 : i64, tpu.core_type = #tpu.core_type<tc>, window_params = [{transform_indices = @transform_0, window_bounds = array<i64: 1>}, {transform_indices = @transform_1, window_bounds = array<i64: 16, 128>}, {transform_indices = @transform_2, window_bounds = array<i64: 16, 128>}, {transform_indices = @transform_3, window_bounds = array<i64: 16, 128>}, {transform_indices = @transform_4, window_bounds = array<i64: 16, 128>}]} {
    %c0 = arith.constant 0 : index
    %0 = memref.load %arg1[%c0] : memref<1xf32, #tpu.memory_space<smem>>
    %c0_0 = arith.constant 0 : index
    %c0_1 = arith.constant 0 : index
    %1 = vector.load %arg2[%c0_0, %c0_1] : memref<16x128xf32, #tpu.memory_space<vmem>>, vector<16x128xf32>
    %c0_2 = arith.constant 0 : index
    %c0_3 = arith.constant 0 : index
    %2 = vector.load %arg3[%c0_2, %c0_3] : memref<16x128xf32, #tpu.memory_space<vmem>>, vector<16x128xf32>
    %3 = arith.subf %1, %2 : vector<16x128xf32>
    %4 = math.absf %3 : vector<16x128xf32>
    %5 = vector.broadcast %0 : f32 to vector<16x128xf32>
    %6 = arith.cmpf olt, %4, %5 : vector<16x128xf32>
    %cst = arith.constant 0.000000e+00 : f32
    %7 = vector.broadcast %cst : f32 to vector<16x128xf32>
    %8 = arith.select %6, %7, %1 : vector<16x128xi1>, vector<16x128xf32>
    %c0_4 = arith.constant 0 : index
    %c0_5 = arith.constant 0 : index
    %9 = vector.load %arg4[%c0_4, %c0_5] : memref<16x128xf32, #tpu.memory_space<vmem>>, vector<16x128xf32>
    tpu.vector_store %arg4[%c0_4, %c0_5], %8 {strides = array<i32>} : memref<16x128xf32, #tpu.memory_space<vmem>>, vector<16x128xf32>,
    %10 = arith.select %6, %2, %1 : vector<16x128xi1>, vector<16x128xf32>
    %c0_6 = arith.constant 0 : index
    %c0_7 = arith.constant 0 : index
    %11 = vector.load %arg5[%c0_6, %c0_7] : memref<16x128xf32, #tpu.memory_space<vmem>>, vector<16x128xf32>
    tpu.vector_store %arg5[%c0_6, %c0_7], %10 {strides = array<i32>} : memref<16x128xf32, #tpu.memory_space<vmem>>, vector<16x128xf32>,
    return
  }
  func.func @transform_0(%arg0: i32) -> i32 {
    %c0_i32 = arith.constant 0 : i32
    %c0_i32_0 = arith.constant 0 : i32
    return %c0_i32 : i32
  }
  func.func @transform_1(%arg0: i32) -> (i32, i32) {
    %c0_i32 = arith.constant 0 : i32
    %c0_i32_0 = arith.constant 0 : i32
    return %arg0, %c0_i32 : i32, i32
  }
  func.func @transform_2(%arg0: i32) -> (i32, i32) {
    %c0_i32 = arith.constant 0 : i32
    %c0_i32_0 = arith.constant 0 : i32
    return %arg0, %c0_i32 : i32, i32
  }
  func.func @transform_3(%arg0: i32) -> (i32, i32) {
    %c0_i32 = arith.constant 0 : i32
    %c0_i32_0 = arith.constant 0 : i32
    return %arg0, %c0_i32 : i32, i32
  }
  func.func @transform_4(%arg0: i32) -> (i32, i32) {
    %c0_i32 = arith.constant 0 : i32
    %c0_i32_0 = arith.constant 0 : i32
    return %arg0, %c0_i32 : i32, i32
  }
}

</mosaic_0001>

<llo_original>
// kernel: _remove_consistent_pixels.1
$region0: #{_remove_consistent_pixels.1}
  #allocation0 [shape = 'u32[]', space=smem, size = 0x4, offset = 0x4, fixed_abs, tag = 'smem constant byte address 0x4 - core index']
  #allocation1 [shape = 'u32[144,128]{1,0:T(1,128)}', space=vmem, size = 0x12000, scoped, tag = 'internal scratch']
  #allocation2 [shape = 'f32[1]{0:T(128)S(6)}', space=smem, size = 0x200, scoped, tag = 'scoped memory for _remove_consistent_pixels.1']
  %s0 = inlined_call_operand.<no memory space> [shape: f32[1], index: 0, kind: input, shape index: {}]
  %s1 = inlined_call_operand.vmem [shape: f32[16,128], index: 1, kind: input, shape index: {}, may-alias: {1,3}]
  %s2 = inlined_call_operand.vmem [shape: f32[16,128], index: 2, kind: input, shape index: {}, may-alias: {2,4}]
  %s3 = inlined_call_operand.vmem [shape: f32[16,128], index: 3, kind: output, shape index: {0}, may-alias: {1,3}]
  %s4 = inlined_call_operand.vmem [shape: f32[16,128], index: 4, kind: output, shape index: {1}, may-alias: {2,4}]
  %5 = xla_tuple %s3, %s4
  %s6 = sld [smem:[#allocation0]]
  $region30: #{_remove_consistent_pixels.1} parent=0
    _
  %s8 = ssub.s32 1, %s6
  %s9 = scalar_select 0, %s8, %s6
  %10 = sst [smem:[#allocation2]] %s0
  // Predicated region
  $region2: #{_remove_consistent_pixels.1} parent=0 // pred_check
    _
  $region3: #{_remove_consistent_pixels.1} parent=0 // pred_check_branch
    %12 = sbr.rel (0) target = $region5
  $region4: #{_remove_consistent_pixels.1} parent=0 // pred_region
    _
  $region5: #{_remove_consistent_pixels.1} parent=0 // pred_fallthru
    _
  // Predicated region
  $region6: #{_remove_consistent_pixels.1} parent=0 // pred_check
    _
  $region7: #{_remove_consistent_pixels.1} parent=0 // pred_check_branch
    %14 = sbr.rel (0) target = $region9
  $region8: #{_remove_consistent_pixels.1} parent=0 // pred_region
    _
  $region9: #{_remove_consistent_pixels.1} parent=0 // pred_fallthru
    _
  // Predicated region
  $region10: #{_remove_consistent_pixels.1} parent=0 // pred_check
    _
  $region11: #{_remove_consistent_pixels.1} parent=0 // pred_check_branch
    %16 = sbr.rel (0) target = $region13
  $region12: #{_remove_consistent_pixels.1} parent=0 // pred_region
    _
  $region13: #{_remove_consistent_pixels.1} parent=0 // pred_fallthru
    _
  %s17 = sld [smem:[#allocation2]]
  %v18 = vld [vmem:[%s1] sm:$0xff]
  %v19 = vld [vmem:[%s1 + $0x8] sm:$0xff]
  %v20 = vld [vmem:[%s2] sm:$0xff]
  %v21 = vld [vmem:[%s2 + $0x8] sm:$0xff]
  %v22 = vsub.f32 %v18, %v20
  %v23 = vsub.f32 %v19, %v21
  %v24 = vand.u32 2147483647, %v22
  %v25 = vand.u32 2147483647, %v23
  %v26 = vstv %s17
  %vm27 = vcmp.lt.f32.partialorder %v24, %v26
  %vm28 = vcmp.lt.f32.partialorder %v25, %v26
  %v29 = vsel %vm27, 0.0, %v18
  %v30 = vsel %vm28, 0.0, %v19
  %31 = vst [vmem:[%s3] sm:$0xff] %v29
  %32 = vst [vmem:[%s3 + $0x8] sm:$0xff] %v30
  %v33 = vsel %vm27, %v20, %v18
  %v34 = vsel %vm28, %v21, %v19
  %35 = vst [vmem:[%s4] sm:$0xff] %v33
  %36 = vst [vmem:[%s4 + $0x8] sm:$0xff] %v34
  // Predicated region
  $region14: #{_remove_consistent_pixels.1} parent=0 // pred_check
    _
  $region15: #{_remove_consistent_pixels.1} parent=0 // pred_check_branch
    %38 = sbr.rel (0) target = $region17
  $region16: #{_remove_consistent_pixels.1} parent=0 // pred_region
    _
  $region17: #{_remove_consistent_pixels.1} parent=0 // pred_fallthru
    _
  // Predicated region
  $region18: #{_remove_consistent_pixels.1} parent=0 // pred_check
    _
  $region19: #{_remove_consistent_pixels.1} parent=0 // pred_check_branch
    %40 = sbr.rel (0) target = $region21
  $region20: #{_remove_consistent_pixels.1} parent=0 // pred_region
    _
  $region21: #{_remove_consistent_pixels.1} parent=0 // pred_fallthru
    _
  // Predicated region
  $region22: #{_remove_consistent_pixels.1} parent=0 // pred_check
    _
  $region23: #{_remove_consistent_pixels.1} parent=0 // pred_check_branch
    %42 = sbr.rel (0) target = $region25
  $region24: #{_remove_consistent_pixels.1} parent=0 // pred_region
    _
  $region25: #{_remove_consistent_pixels.1} parent=0 // pred_fallthru
    _
  // Predicated region
  $region26: #{_remove_consistent_pixels.1} parent=0 // pred_check
    _
  $region27: #{_remove_consistent_pixels.1} parent=0 // pred_check_branch
    %44 = sbr.rel (0) target = $region29
  $region28: #{_remove_consistent_pixels.1} parent=0 // pred_region
    _
  $region29: #{_remove_consistent_pixels.1} parent=0 // pred_fallthru
    _

</llo_original>
